<compile_context>
chip_gen: v6e
topology: v6e:2x2x1
jax: 0.10.0
libtpu: 0.0.40
codegen_flags: <defaults>
</compile_context>

<pallas_src>
import jax
import jax.numpy as jnp
from jax.experimental import pallas as pl
from jax.experimental.pallas import tpu as pltpu

N_JOINTS = 24
N_DIMS = 3
_SMALL_ELEMS = 2_000_000   # below this many output elems, fused XLA wins on dispatch


def _kpcat_kernel(pts_ref, kps_ref, out_ref):
    # pts_ref: (1, TP, D)   kps_ref: (1, 1, J*D)   out_ref: (1, TP, D + J*D)
    d = pts_ref.shape[-1]
    tp = pts_ref.shape[1]
    jd = kps_ref.shape[-1]
    # Two direct slice stores (no lane-axis concatenate -> no per-row XLU
    # merge and no extra (TP, D+J*D) intermediate holding vregs live).
    out_ref[0, :, :d] = pts_ref[0]
    out_ref[0, :, d:] = jnp.broadcast_to(kps_ref[0], (tp, jd))


def _round_up(x, m):
    return ((x + m - 1) // m) * m


def _sublane_min(dtype):
    itemsize = jnp.dtype(dtype).itemsize
    if itemsize >= 4:
        return 8
    if itemsize == 2:
        return 16
    return 32


def _max_tp():
    """Tile-row cap; larger on v7x-class chips (3.2 TB/s HBM needs bigger
    blocks to stay off the ~0.35 us/step pipeline-overhead floor)."""
    try:
        info = pltpu.get_tpu_info()
        if "7" in str(getattr(info, "chip_version", "")):
            return 16384
    except Exception:
        pass
    return 8192


def _pick_tp(B, P, dtype):
    """Largest sublane-aligned P-tile that amortizes per-step overhead while
    keeping >= 4 grid programs (so both v7x TensorCores have work)."""
    sub = _sublane_min(dtype)
    tp = min(_max_tp(), _round_up(P, sub))
    while B * pl.cdiv(P, tp) < 4 and tp > sub:
        tp = max(sub, _round_up(tp // 2, sub))
    return tp


def _vmem_limit_bytes(tp, d, jd, itemsize):
    """Scoped-VMEM request covering the double-buffered, lane-padded blocks."""
    lane = 128
    pts_buf = tp * _round_up(d, lane) * itemsize        # 3 lanes padded to 128
    out_buf = tp * _round_up(d + jd, lane) * itemsize   # 75 lanes padded to 128
    kps_buf = 8 * _round_up(jd, lane) * itemsize        # tiny
    budget = 2 * (pts_buf + out_buf + kps_buf)          # double-buffered pipeline
    # Floor at the v5e default (16 MiB); cap well under v7x's 64 MiB physical.
    return int(min(max(budget + (8 << 20), 16 << 20), 48 << 20))


def kp_cat_encode(pts, pts_t, kps, *, force_pallas=False):
    """JAX/Pallas equivalent of KPCatEncoder.forward(pts, pts_t, kps)."""
    del pts_t  # accepted for API parity; the PyTorch forward never uses it.
    B, P, D = pts.shape
    J = kps.shape[-2]
    assert kps.shape == (B, J, D)

    out_dtype = jnp.result_type(pts.dtype, kps.dtype)
    pts = pts.astype(out_dtype)
    kps_flat = kps.astype(out_dtype).reshape(B, 1, J * D)   # tiny, contiguous

    # TODO(synk): 72/75 floats per output row are identical across all P rows;
    # the biggest possible win is to not materialize this broadcast at all and
    # fuse kps into the downstream consumer (call-site / design change).
    if not force_pallas and B * P * (D + J * D) < _SMALL_ELEMS:
        # Kernel-dispatch overhead dwarfs the HBM work at small/mid shapes.
        kp_rows = jnp.broadcast_to(kps_flat, (B, P, J * D))
        return jnp.concatenate([pts, kp_rows], axis=-1)

    TP = _pick_tp(B, P, out_dtype)
    grid = (B, pl.cdiv(P, TP))   # partial final P-block is masked by Pallas

    return pl.pallas_call(
        _kpcat_kernel,
        out_shape=jax.ShapeDtypeStruct((B, P, D + J * D), out_dtype),
        grid=grid,
        in_specs=[
            # NOTE: if profiling ever shows the strided 12 B/row pts read
            # exposed, add pipeline_mode=pl.Buffered(3) to this spec.
            pl.BlockSpec((1, TP, D), lambda b, p: (b, p, 0)),
            pl.BlockSpec((1, 1, J * D), lambda b, p: (b, 0, 0)),
        ],
        out_specs=pl.BlockSpec((1, TP, D + J * D), lambda b, p: (b, p, 0)),
        compiler_params=pltpu.CompilerParams(
            dimension_semantics=("parallel", "parallel"),
            vmem_limit_bytes=_vmem_limit_bytes(
                TP, D, J * D, jnp.dtype(out_dtype).itemsize)),
    )(pts, kps_flat)


if __name__ == "__main__":
    key = jax.random.PRNGKey(0)
    k1, k2 = jax.random.split(key)

    B, P = 2, 16
    pts = jax.random.normal(k1, (B, P, N_DIMS), dtype=jnp.float32)
    kps = jax.random.normal(k2, (B, N_JOINTS, N_DIMS), dtype=jnp.float32)

    # Force the Pallas path to exercise the kernel at this small demo shape.
    out = kp_cat_encode(pts, None, kps, force_pallas=True)
    out = jax.block_until_ready(out)

    # Reference (mirrors the PyTorch expression).
    kps_flat = kps.reshape(B, 1, N_JOINTS * N_DIMS)
    ref = jnp.concatenate(
        [pts, jnp.broadcast_to(kps_flat, (B, P, N_JOINTS * N_DIMS))], axis=-1)
    assert out.shape == (B, P, N_JOINTS * N_DIMS + N_DIMS)
    assert jnp.allclose(out, ref), "mismatch vs reference"

    # Small-shape fallback path (plain XLA) must agree as well.
    out_small = jax.block_until_ready(kp_cat_encode(pts, None, kps))
    assert out_small.shape == out.shape
    assert jnp.allclose(out_small, ref)

    print("KERNEL_OK")
</pallas_src>

<mosaic_0001>
module attributes {stable_mosaic.version = 11 : i64} {
  func.func @_kpcat_kernel(%arg0: i32, %arg1: i32, %arg2: memref<1x8x3xf32, #tpu.memory_space<vmem>>, %arg3: memref<1x1x72xf32, #tpu.memory_space<vmem>>, %arg4: memref<1x8x75xf32, #tpu.memory_space<vmem>>) attributes {dimension_semantics = [#tpu.dimension_semantics<parallel>, #tpu.dimension_semantics<parallel>], iteration_bounds = array<i64: 2, 2>, scalar_prefetch = 0 : i64, scratch_operands = 0 : i64, tpu.core_type = #tpu.core_type<tc>, window_params = [{transform_indices = @transform_0, window_bounds = array<i64: 1, 8, 3>}, {transform_indices = @transform_1, window_bounds = array<i64: 1, 1, 72>}, {transform_indices = @transform_2, window_bounds = array<i64: 1, 8, 75>}]} {
    %c0 = arith.constant 0 : index
    %c0_0 = arith.constant 0 : index
    %c0_1 = arith.constant 0 : index
    %0 = vector.load %arg2[%c0, %c0_0, %c0_1] : memref<1x8x3xf32, #tpu.memory_space<vmem>>, vector<1x8x3xf32>
    %1 = vector.shape_cast %0 : vector<1x8x3xf32> to vector<8x3xf32>
    %c0_2 = arith.constant 0 : index
    %c0_3 = arith.constant 0 : index
    %c0_4 = arith.constant 0 : index
    %2 = vector.load %arg4[%c0_2, %c0_3, %c0_4] : memref<1x8x75xf32, #tpu.memory_space<vmem>>, vector<1x8x3xf32>
    %3 = vector.shape_cast %2 : vector<1x8x3xf32> to vector<8x3xf32>
    %4 = vector.shape_cast %1 : vector<8x3xf32> to vector<1x8x3xf32>
    tpu.vector_store %arg4[%c0_2, %c0_3, %c0_4], %4 {strides = array<i32>} : memref<1x8x75xf32, #tpu.memory_space<vmem>>, vector<1x8x3xf32>,
    %c0_5 = arith.constant 0 : index
    %c0_6 = arith.constant 0 : index
    %c0_7 = arith.constant 0 : index
    %5 = vector.load %arg3[%c0_5, %c0_6, %c0_7] : memref<1x1x72xf32, #tpu.memory_space<vmem>>, vector<1x1x72xf32>
    %6 = vector.shape_cast %5 : vector<1x1x72xf32> to vector<1x72xf32>
    %7 = vector.shape_cast %6 : vector<1x72xf32> to vector<1x72xf32>
    %8 = vector.broadcast %7 : vector<1x72xf32> to vector<8x72xf32>
    %c0_8 = arith.constant 0 : index
    %c0_9 = arith.constant 0 : index
    %c3 = arith.constant 3 : index
    %9 = vector.load %arg4[%c0_8, %c0_9, %c3] : memref<1x8x75xf32, #tpu.memory_space<vmem>>, vector<1x8x72xf32>
    %10 = vector.shape_cast %9 : vector<1x8x72xf32> to vector<8x72xf32>
    %11 = vector.shape_cast %8 : vector<8x72xf32> to vector<1x8x72xf32>
    tpu.vector_store %arg4[%c0_8, %c0_9, %c3], %11 {strides = array<i32>} : memref<1x8x75xf32, #tpu.memory_space<vmem>>, vector<1x8x72xf32>,
    return
  }
  func.func @transform_0(%arg0: i32, %arg1: i32) -> (i32, i32, i32) {
    %c0_i32 = arith.constant 0 : i32
    %c0_i32_0 = arith.constant 0 : i32
    return %arg0, %arg1, %c0_i32 : i32, i32, i32
  }
  func.func @transform_1(%arg0: i32, %arg1: i32) -> (i32, i32, i32) {
    %c0_i32 = arith.constant 0 : i32
    %c0_i32_0 = arith.constant 0 : i32
    %c0_i32_1 = arith.constant 0 : i32
    return %arg0, %c0_i32, %c0_i32_0 : i32, i32, i32
  }
  func.func @transform_2(%arg0: i32, %arg1: i32) -> (i32, i32, i32) {
    %c0_i32 = arith.constant 0 : i32
    %c0_i32_0 = arith.constant 0 : i32
    return %arg0, %arg1, %c0_i32 : i32, i32, i32
  }
}

</mosaic_0001>

<llo_original>
// kernel: tpu_custom_call.1
$region0: #{tpu_custom_call.1}
  #allocation0 [shape = 'u32[]', space=smem, size = 0x4, offset = 0x4, fixed_abs, tag = 'smem constant byte address 0x4 - core index']
  #allocation1 [shape = 'u32[144,128]{1,0:T(1,128)}', space=vmem, size = 0x12000, scoped, tag = 'internal scratch']
  %s0 = inlined_call_operand.vmem [shape: f32[2,16,3], index: 0, kind: input, shape index: {}]
  %s1 = inlined_call_operand.vmem [shape: f32[2,1,72], index: 1, kind: input, shape index: {}]
  %s2 = inlined_call_operand.hbm [shape: f32[2,16,75], index: 2, kind: output, shape index: {}]
  %s3 = sld [smem:[#allocation0]]
  $region41: #{tpu_custom_call.1} parent=0
    _
  %s5 = ssub.s32 1, %s3
  %s6 = scalar_select 0, %s5, %s3
  $region1: #{tpu_custom_call.1} parent=0
    #allocation2 [shape = 'u8[8192]{0}', space=vmem, size = 0x2000, scoped, tag = 'output window, operand 0']
    #allocation3 [shape = 's32[2]{0}', space=sflag, size = 0x8, scoped, tag = 'scoped memory for tpu_custom_call.1']
    %7 = vsyncpa [#allocation3], 0
    %s8 = scalar_lea.sflag [#allocation3], 1
    %9 = vsyncpa %s8, 0
    loop: start=0, step=1, limit=6
    $region2: #{tpu_custom_call.1} parent=1 // loop_pre_header
      _
    $region3: #{tpu_custom_call.1} parent=1 // loop_header
      %s11 = sphi 0, %s15
      %p12 = scmp.ge.s32.totalorder %s11, 6
      %s18 = sphi 0, %s30
      %s19 = sphi 0, %s26
      %s20 = sphi 0, %s18
      %s21 = sphi 0, %s19
      %s22 = sphi 0, %s20
      %s23 = sphi 0, %s21
      %s35 = sphi 0, %s37
      %s38 = sphi 0, %s35
      %s39 = sphi 0, %s38
      %s55 = sphi 0, %s39
      %s61 = sphi 0, %s63
      %s64 = sphi 0, %s61
      %s65 = sphi 0, %s64
      %s81 = sphi 0, %s65
      %s89 = sphi 0, %s91
      %s92 = sphi 0, %s89
      %s93 = sphi 0, %s92
      %s109 = sphi 0, %s93
    $region4: #{tpu_custom_call.1} parent=1 // loop_header_branch
      %14 = sbr.rel (%p12) target = $region8
    $region5: #{tpu_custom_call.1} parent=1 // loop_body
      %s16 = ssub.s32 %s11, 1
      %s17 = ssub.s32 %s11, 2
      %s24 = sadd.s32 1, %s19
      %p25 = scmp.ge.s32.totalorder %s24, 2
      %s26 = scalar_select %p25, 0, %s24
      %s27 = sadd.s32 1, %s18
      %s28 = scalar_select %p25, %s27, %s18
      %p29 = scmp.ge.s32.totalorder %s28, 2
      %s30 = scalar_select %p29, 0, %s28
      %s31 = ssub.s32 %s18, %s30
      %s32 = ssub.s32 %s19, %s26
      %s33 = sor.u32 %s31, %s32
      %p34 = scmp.eq.s32.totalorder %s33, 0
      %s36 = sadd.s32 %s35, 1
      %s37 = scalar_select %p34, %s35, %s36
      %p40 = pneg %p34
      %p41 = scmp.eq.s32.totalorder %s11, 3
      %p42 = por %p40, %p41
      %p43 = scmp.ne.s32.totalorder %s35, %s38
      %p44 = scmp.eq.s32.totalorder %s11, 0
      %p45 = por %p43, %p44
      %p46 = scmp.ne.s32.totalorder %s35, %s38
      %p47 = scmp.eq.s32.totalorder %s16, 3
      %p48 = por %p46, %p47
      %p49 = scmp.ne.s32.totalorder %s38, %s39
      %p50 = scmp.eq.s32.totalorder %s16, 0
      %p51 = por %p49, %p50
      %p52 = scmp.ne.s32.totalorder %s38, %s39
      %p53 = scmp.eq.s32.totalorder %s17, 3
      %p54 = por %p52, %p53
      %p56 = scmp.ne.s32.totalorder %s39, %s55
      %p57 = scmp.eq.s32.totalorder %s17, 0
      %p58 = por %p56, %p57
      %s59 = ssub.s32 %s18, %s30
      %p60 = scmp.eq.s32.totalorder %s59, 0
      %s62 = sadd.s32 %s61, 1
      %s63 = scalar_select %p60, %s61, %s62
      %p66 = pneg %p60
      %p67 = scmp.eq.s32.totalorder %s11, 3
      %p68 = por %p66, %p67
      %p69 = scmp.ne.s32.totalorder %s61, %s64
      %p70 = scmp.eq.s32.totalorder %s11, 0
      %p71 = por %p69, %p70
      %p72 = scmp.ne.s32.totalorder %s61, %s64
      %p73 = scmp.eq.s32.totalorder %s16, 3
      %p74 = por %p72, %p73
      %p75 = scmp.ne.s32.totalorder %s64, %s65
      %p76 = scmp.eq.s32.totalorder %s16, 0
      %p77 = por %p75, %p76
      %p78 = scmp.ne.s32.totalorder %s64, %s65
      %p79 = scmp.eq.s32.totalorder %s17, 3
      %p80 = por %p78, %p79
      %p82 = scmp.ne.s32.totalorder %s65, %s81
      %p83 = scmp.eq.s32.totalorder %s17, 0
      %p84 = por %p82, %p83
      %s85 = ssub.s32 %s18, %s30
      %s86 = ssub.s32 %s19, %s26
      %s87 = sor.u32 %s85, %s86
      %p88 = scmp.eq.s32.totalorder %s87, 0
      %s90 = sadd.s32 %s89, 1
      %s91 = scalar_select %p88, %s89, %s90
      %p94 = pneg %p88
      %p95 = scmp.eq.s32.totalorder %s11, 3
      %p96 = por %p94, %p95
      %p97 = scmp.ne.s32.totalorder %s89, %s92
      %p98 = scmp.eq.s32.totalorder %s11, 0
      %p99 = por %p97, %p98
      %p100 = scmp.ne.s32.totalorder %s89, %s92
      %p101 = scmp.eq.s32.totalorder %s16, 3
      %p102 = por %p100, %p101
      %p103 = scmp.ne.s32.totalorder %s92, %s93
      %p104 = scmp.eq.s32.totalorder %s16, 0
      %p105 = por %p103, %p104
      %p106 = scmp.ne.s32.totalorder %s92, %s93
      %p107 = scmp.eq.s32.totalorder %s17, 3
      %p108 = por %p106, %p107
      %p110 = scmp.ne.s32.totalorder %s93, %s109
      %p111 = scmp.eq.s32.totalorder %s17, 0
      %p112 = por %p110, %p111
      %p113 = scmp.le.s32.totalorder 1, %s11
      %p114 = scmp.lt.s32.totalorder %s11, 5
      %p115 = pnand %p113, %p114
      %p116 = pneg %p115
      // Predicated region
      $region9: #{tpu_custom_call.1} parent=5 // pred_check
        _
      $region10: #{tpu_custom_call.1} parent=5 // pred_check_branch
        %118 = sbr.rel (%p115) target = $region12
      $region11: #{tpu_custom_call.1} parent=5 // pred_region
        %s119 = ssub.s32 %s11, 1
      $region12: #{tpu_custom_call.1} parent=5 // pred_fallthru
        _
      %p120 = scmp.lt.s32.totalorder %s11, 4
      // Predicated region
      $region13: #{tpu_custom_call.1} parent=5 // pred_check
        %p121 = pneg %p120
      $region14: #{tpu_custom_call.1} parent=5 // pred_check_branch
        %123 = sbr.rel (%p121) target = $region16
      $region15: #{tpu_custom_call.1} parent=5 // pred_region
        // Predicated region
        $region17: #{tpu_custom_call.1} parent=15 // pred_check
          %p124 = pneg %p45
        $region18: #{tpu_custom_call.1} parent=15 // pred_check_branch
          %126 = sbr.rel (%p124) target = $region20
        $region19: #{tpu_custom_call.1} parent=15 // pred_region
          %p127 = scmp.lt.s32.totalorder %s18, 1
          %s128 = scalar_select %p127, %s18, 1
          %p129 = scmp.lt.s32.totalorder %s19, 1
          %s130 = scalar_select %p129, %s19, 1
          %s131 = smul.addr %s128, 2
          %s132 = sadd.s32 %s130, %s131
          %s133 = smul.addr %s132, 8
          %s134 = scalar_lea.vmem %s0, %s133
        $region20: #{tpu_custom_call.1} parent=15 // pred_fallthru
          _
        // Predicated region
        $region21: #{tpu_custom_call.1} parent=15 // pred_check
          %p135 = pneg %p71
        $region22: #{tpu_custom_call.1} parent=15 // pred_check_branch
          %137 = sbr.rel (%p135) target = $region24
        $region23: #{tpu_custom_call.1} parent=15 // pred_region
          %p138 = scmp.lt.s32.totalorder %s18, 1
          %s139 = scalar_select %p138, %s18, 1
          %s140 = scalar_lea.vmem %s1, %s139
        $region24: #{tpu_custom_call.1} parent=15 // pred_fallthru
          _
      $region16: #{tpu_custom_call.1} parent=5 // pred_fallthru
        _
      %p141 = scmp.le.s32.totalorder 1, %s11
      %p142 = scmp.lt.s32.totalorder %s11, 5
      %p143 = pnand %p141, %p142
      %p144 = pneg %p143
      // Predicated region
      $region25: #{tpu_custom_call.1} parent=5 // pred_check
        _
      $region26: #{tpu_custom_call.1} parent=5 // pred_check_branch
        %146 = sbr.rel (%p143) target = $region28
      $region27: #{tpu_custom_call.1} parent=5 // pred_region
        %s147 = ssub.s32 %s11, 1
        %p148 = scmp.lt.s32.totalorder %s20, 1
        %s149 = scalar_select %p148, %s20, 1
        %p150 = scmp.lt.s32.totalorder %s21, 1
        %s151 = scalar_select %p150, %s21, 1
        %s152 = smul.addr %s149, 2
        %s153 = sadd.s32 %s151, %s152
        %s154 = smul.addr %s153, 8
        %s155 = scalar_lea.vmem %s0, %s154
        %p156 = pneg %p51
        %p157 = pneg %p48
        %p158 = scmp.lt.s32.totalorder %s20, 1
        %s159 = scalar_select %p158, %s20, 1
        %s160 = scalar_lea.vmem %s1, %s159
        %p161 = pneg %p77
        %p162 = pneg %p74
        %p163 = pneg %p105
        %p164 = pneg %p102
        %s165 = sand.u32 %s92, 1
        %s166 = scalar_lea.sflag [#allocation3], %s165
        %s167 = sand.u32 %s92, 1
        %s168 = smul.addr %s167, 8
        %s169 = scalar_lea.vmem [#allocation2], %s168
        %p170 = scmp.lt.s32.totalorder %s20, 1
        %s171 = scalar_select %p170, %s20, 1
        %p172 = scmp.lt.s32.totalorder %s21, 1
        %s173 = scalar_select %p172, %s21, 1
        %s174 = smul.addr %s171, 2
        %s175 = sadd.s32 %s173, %s174
        %s176 = smul.addr %s175, 8
        %s177 = scalar_lea.vmem %s0, %s176
        %p178 = scmp.lt.s32.totalorder %s20, 1
        %s179 = scalar_select %p178, %s20, 1
        %s180 = scalar_lea.vmem %s1, %s179
        %v181 = vld [vmem:[%s177] sm:$0xff]
        %vm182 = vcmask 23552
        %183 = vst.msk [vmem:[%s169] sm:$0xff] %vm182, %v181
        %v184 = vld [vmem:[%s180] sm:$0x1]
        %v186 = vlaneseq
        %v187 = vshrl.u32 %v186, 7
        %v188 = vsub.s32 0, %v187
        %v189 = vrot.slane %v184, %v188
        %190 = vrot.lane.b32.xlu0 %v189, 3
        %v191 = vpop.permute.xlu0 %190
        %vm193 = vcmask 613400
        %194 = vst.msk [vmem:[%s169] sm:$0xff] %vm193, %v191
        %s195 = sand.u32 %s92, 1
        %s196 = scalar_lea.sflag [#allocation3], %s195
        %s197 = sand.u32 %s92, 1
        %s198 = smul.addr %s197, 8
        %s199 = scalar_lea.vmem [#allocation2], %s198
        // Predicated region
        $region29: #{tpu_custom_call.1} parent=27 // pred_check
          %p200 = pneg %p102
        $region30: #{tpu_custom_call.1} parent=27 // pred_check_branch
          %202 = sbr.rel (%p200) target = $region32
        $region31: #{tpu_custom_call.1} parent=27 // pred_region
          %s204 = ssub.s32 128, 128
          %205 = vsyncadd %s196, %s204
          %s206 = smul.addr %s20, 2
          %s207 = sadd.s32 %s21, %s206
          %s208 = smul.addr %s207, 128
          %s209 = scalar_lea.hbm %s2, %s208
          %s211 = sshll.u32 %s199, 4
          %s212 = int_to_ptr.vmem [resolvable:$true] %s211
          %214 = dma.vmem_to_hbm [thread:$0]  %s212, 128, %s209, %s196
        $region32: #{tpu_custom_call.1} parent=27 // pred_fallthru
          _
      $region28: #{tpu_custom_call.1} parent=5 // pred_fallthru
        _
      %p215 = scmp.le.s32.totalorder 2, %s11
      // Predicated region
      $region33: #{tpu_custom_call.1} parent=5 // pred_check
        %p216 = pneg %p215
      $region34: #{tpu_custom_call.1} parent=5 // pred_check_branch
        %218 = sbr.rel (%p216) target = $region36
      $region35: #{tpu_custom_call.1} parent=5 // pred_region
        %s219 = ssub.s32 %s11, 2
        // Predicated region
        $region37: #{tpu_custom_call.1} parent=35 // pred_check
          %p220 = pneg %p108
        $region38: #{tpu_custom_call.1} parent=35 // pred_check_branch
          %222 = sbr.rel (%p220) target = $region40
        $region39: #{tpu_custom_call.1} parent=35 // pred_region
          %s223 = sand.u32 %s93, 1
          %s224 = scalar_lea.sflag [#allocation3], %s223
          %s225 = sand.u32 %s93, 1
          %s226 = smul.addr %s225, 8
          %s227 = scalar_lea.vmem [#allocation2], %s226
          %228 = dma.done %s224, 128
        $region40: #{tpu_custom_call.1} parent=35 // pred_fallthru
          _
      $region36: #{tpu_custom_call.1} parent=5 // pred_fallthru
        _
    $region6: #{tpu_custom_call.1} parent=1 // loop_footer
      %s15 = sadd.s32 1, %s11
    $region7: #{tpu_custom_call.1} parent=1 // loop_footer_branch
      %10 = sbr.rel target = $region3
    $region8: #{tpu_custom_call.1} parent=1 // loop_exit
      _
    %229 = vsyncpa [#allocation3], 1
    %s230 = scalar_lea.sflag [#allocation3], 1
    %231 = vsyncpa %s230, 1

</llo_original>
